<compile_context>
chip_gen: v6e
topology: v6e:2x2x1
jax: 0.10.0
libtpu: 0.0.40
codegen_flags: <defaults>
</compile_context>

<pallas_src>
import math

import jax
import jax.numpy as jnp
from jax.experimental import pallas as pl
from jax.experimental.pallas import tpu as pltpu


def attention_kernel(hp_ref, enc_ref, w2t_ref, v_ref, out_ref):
    tTB, H = enc_ref.shape          # dense 2-D enc tile: (tT*B, H)
    B = hp_ref.shape[0]
    tT = tTB // B

    # Encoder half of the Linear: ONE 2-D MXU GEMM straight on the DMA'd
    # (tT*B, H) layout — no pre-matmul relayout/reshape.
    z2 = jnp.dot(enc_ref[...], w2t_ref[...],
                 preferred_element_type=jnp.float32)            # (tT*B, H)

    # Padded 3-D view confined to the (cheap) softmax / score section.
    # hp = hidden @ W1^T + bias is precomputed once in the wrapper.
    z = z2.reshape(tT, B, H) + hp_ref[...][None, :, :]          # (tT, B, H)

    # torch F.softmax(x) (no dim, ndim==3) -> legacy dim=0: softmax over the
    # batch axis, which is axis=1 in this seq-first (tT, B, H) layout.
    # (Per-(t,h) normalization only couples across B, so T-tiling is safe.)
    m = jnp.max(z, axis=1, keepdims=True)
    e = jnp.exp(z - m)
    denom = jnp.sum(e, axis=1, keepdims=True)
    sm = e / denom                                              # exact divide

    # energy.transpose(1,2) then bmm with v  <=>  score[b,t] = sum_h v[h]*sm[t,b,h]
    score_tb = jnp.sum(sm * v_ref[...][None, :, :], axis=-1)    # (tT, B)

    # relu, then small in-VMEM transpose to the lane-dense (B, tT) output block.
    # NOTE: for a padded last T tile the padded rows may hold garbage; they only
    # land in dropped output columns (softmax couples only across B).
    out_ref[...] = jnp.maximum(score_tb, 0.0).T.astype(out_ref.dtype)


def _round_up(x, m):
    return ((x + m - 1) // m) * m


def _vmem_config():
    """Generation-aware (vmem_limit_bytes, tile_budget_bytes)."""
    try:
        cap = int(pltpu.get_tpu_info().vmem_capacity_bytes)
    except Exception:
        cap = 64 << 20                      # conservative fallback (v7x-sized)
    if cap >= (96 << 20):                   # v5e / v6e: 128 MiB physical VMEM
        return 64 << 20, 24 << 20
    return 32 << 20, 12 << 20               # v7x: 64 MiB physical VMEM


def _choose_tile_t(T, B, H, tile_budget_bytes):
    """Pick a T tile accounting for (8,128) layout padding and resident,
    double-buffered weights. Whole T if it fits (unless T is large enough that
    splitting into >=2 grid steps helps v7x megacore); otherwise a multiple of
    128 (keeps the (B,tT) output block and (tT*B,H) input block legal)."""
    Hp = _round_up(max(H, 1), 128)
    Bp = _round_up(max(B, 1), 8)
    enc_per_t = B * Hp * 4                  # dense 2-D enc rows per seq step (f32)
    tmp_per_t = Bp * Hp * 4                 # padded 3-D f32 temporaries per step
    per_t = 2 * enc_per_t + 3 * tmp_per_t   # 2 pipeline bufs + z/e/sm temps
    resident = 2 * (Hp * Hp * 4)            # w2t (double-buffered resident)
    resident += 2 * (Bp * Hp * 4)           # hp
    resident += 2 * (8 * Hp * 4)            # v
    budget = max(tile_budget_bytes - resident, per_t)
    max_t = max(1, budget // per_t)

    if T <= max_t:
        if T >= 256:
            # Split so the "parallel" grid has >=2 steps (v7x second TC).
            return _round_up(pl.cdiv(T, 2), 128)
        return T
    return max(128, (min(max_t, T) // 128) * 128)


def attention_forward(hidden, encoder_outputs, w, bias, v):
    """hidden: (B, H); encoder_outputs: (T, B, H) — native seq-first layout.
    w: (H, 2H) Linear weight; bias: (H,); v: (H,). Returns (B, 1, T)."""
    T, B, H = encoder_outputs.shape
    wt = w.T.astype(jnp.float32)            # (2H, H)
    w1t = wt[:H]                            # multiplies the `hidden` half of the cat
    w2t = wt[H:]                            # multiplies the `encoder_outputs` half

    # Hoisted hidden-half GEMM + bias (tiny; done once, not per grid step).
    hp = (jnp.dot(hidden.astype(jnp.float32), w1t,
                  precision=jax.lax.Precision.HIGHEST)
          + bias.astype(jnp.float32)).reshape(B, H)
    v2 = v.reshape(1, H).astype(jnp.float32)

    vmem_limit, tile_budget = _vmem_config()
    tT = _choose_tile_t(T, B, H, tile_budget)
    grid = (pl.cdiv(T, tT),)

    # Free row-major leading-dim merge in HBM -> dense 2-D GEMM layout in-kernel.
    enc2 = encoder_outputs.astype(jnp.float32).reshape(T * B, H)

    out = pl.pallas_call(
        attention_kernel,
        out_shape=jax.ShapeDtypeStruct((B, T), jnp.float32),
        grid_spec=pltpu.PrefetchScalarGridSpec(
            num_scalar_prefetch=0,
            grid=grid,
            in_specs=[
                pl.BlockSpec((B, H), lambda i: (0, 0)),          # hp (resident)
                pl.BlockSpec((tT * B, H), lambda i: (i, 0)),     # enc tile, 2-D dense
                pl.BlockSpec((H, H), lambda i: (0, 0)),          # w2t (resident)
                pl.BlockSpec((1, H), lambda i: (0, 0)),          # v
            ],
            out_specs=pl.BlockSpec((B, tT), lambda i: (0, i)),
        ),
        compiler_params=pltpu.CompilerParams(
            dimension_semantics=("parallel",),   # T tiles independent -> 2 TCs on v7x
            vmem_limit_bytes=vmem_limit,
        ),
    )(hp, enc2, w2t, v2)

    return out[:, None, :]                        # unsqueeze(1) -> (B, 1, T)


def attention_reference(hidden, encoder_outputs, w, bias, v):
    """Pure-JAX reference matching the PyTorch module (for self-check)."""
    T, B, H = encoder_outputs.shape
    h = jnp.broadcast_to(hidden[:, None, :], (B, T, H))
    enc = jnp.transpose(encoder_outputs, (1, 0, 2))              # (B, T, H)
    x = jnp.concatenate([h, enc], axis=-1)                       # (B, T, 2H)
    z = jnp.dot(x, w.T, precision=jax.lax.Precision.HIGHEST) + bias   # (B, T, H)
    sm = jax.nn.softmax(z, axis=0)                               # legacy F.softmax dim=0
    score = jnp.einsum("h,bth->bt", v, sm,
                       precision=jax.lax.Precision.HIGHEST)      # v . energy over H
    return jnp.maximum(score, 0.0)[:, None, :]                   # (B, 1, T)


if __name__ == "__main__":
    H, B, T = 32, 2, 8

    key = jax.random.PRNGKey(0)
    k1, k2, k3, k4, k5 = jax.random.split(key, 5)

    # Deterministic parameter init matching the module's shapes:
    #   attn = nn.Linear(2H, H): weight (H, 2H), bias (H,)
    #   v = nn.Parameter(rand(H)) re-init uniform(-1/sqrt(H), 1/sqrt(H))
    stdv_lin = 1.0 / math.sqrt(2 * H)
    w = jax.random.uniform(k1, (H, 2 * H), jnp.float32, -stdv_lin, stdv_lin)
    bias = jax.random.uniform(k2, (H,), jnp.float32, -stdv_lin, stdv_lin)
    stdv_v = 1.0 / math.sqrt(H)
    v = jax.random.uniform(k3, (H,), jnp.float32, -stdv_v, stdv_v)

    hidden = jax.random.normal(k4, (B, H), jnp.float32)              # (B, H)
    encoder_outputs = jax.random.normal(k5, (T, B, H), jnp.float32)  # (T, B, H)

    out = attention_forward(hidden, encoder_outputs, w, bias, v)
    out = jax.block_until_ready(out)

    assert out.shape == (B, 1, T), out.shape
    assert bool(jnp.all(out >= 0.0))   # relu output

    ref = attention_reference(hidden, encoder_outputs, w, bias, v)
    assert bool(jnp.allclose(out, ref, rtol=1e-3, atol=1e-4)), (
        float(jnp.max(jnp.abs(out - ref))))

    print("KERNEL_OK")
</pallas_src>

<mosaic_0001>
module attributes {stable_mosaic.version = 11 : i64} {
  func.func @attention_kernel(%arg0: i32, %arg1: memref<2x32xf32, #tpu.memory_space<vmem>>, %arg2: memref<16x32xf32, #tpu.memory_space<vmem>>, %arg3: memref<32x32xf32, #tpu.memory_space<vmem>>, %arg4: memref<1x32xf32, #tpu.memory_space<vmem>>, %arg5: memref<2x8xf32, #tpu.memory_space<vmem>>) attributes {dimension_semantics = [#tpu.dimension_semantics<parallel>], iteration_bounds = array<i64: 1>, scalar_prefetch = 0 : i64, scratch_operands = 0 : i64, tpu.core_type = #tpu.core_type<tc>, window_params = [{pipeline_mode = #tpu.pipeline_mode<synchronous>, transform_indices = @transform_0, window_bounds = array<i64: 2, 32>}, {transform_indices = @transform_1, window_bounds = array<i64: 16, 32>}, {pipeline_mode = #tpu.pipeline_mode<synchronous>, transform_indices = @transform_2, window_bounds = array<i64: 32, 32>}, {pipeline_mode = #tpu.pipeline_mode<synchronous>, transform_indices = @transform_3, window_bounds = array<i64: 1, 32>}, {transform_indices = @transform_4, window_bounds = array<i64: 2, 8>}]} {
    %c0 = arith.constant 0 : index
    %c0_0 = arith.constant 0 : index
    %0 = vector.load %arg2[%c0, %c0_0] : memref<16x32xf32, #tpu.memory_space<vmem>>, vector<16x32xf32>
    %c0_1 = arith.constant 0 : index
    %c0_2 = arith.constant 0 : index
    %1 = vector.load %arg3[%c0_1, %c0_2] : memref<32x32xf32, #tpu.memory_space<vmem>>, vector<32x32xf32>
    %cst = arith.constant dense<0.000000e+00> : vector<16x32xf32>
    %2 = tpu.matmul %0, %1, %cst {dimension_numbers = #tpu.dot_dimension_numbers<[1], [0], [0], [1], [0, 0, 1, 1], [], []>} : vector<16x32xf32>, vector<32x32xf32>, vector<16x32xf32> -> vector<16x32xf32>
    %3 = vector.shape_cast %2 : vector<16x32xf32> to vector<8x2x32xf32>
    %c0_3 = arith.constant 0 : index
    %c0_4 = arith.constant 0 : index
    %4 = vector.load %arg1[%c0_3, %c0_4] : memref<2x32xf32, #tpu.memory_space<vmem>>, vector<2x32xf32>
    %5 = vector.shape_cast %4 : vector<2x32xf32> to vector<1x2x32xf32>
    %6 = vector.broadcast %5 : vector<1x2x32xf32> to vector<8x2x32xf32>
    %7 = arith.addf %3, %6 : vector<8x2x32xf32>
    %cst_5 = arith.constant dense<0xFF800000> : vector<8x32xf32>
    %8 = vector.multi_reduction <maximumf>, %7, %cst_5 [1] : vector<8x2x32xf32> to vector<8x32xf32>
    %9 = vector.shape_cast %8 : vector<8x32xf32> to vector<8x1x32xf32>
    %10 = vector.broadcast %9 : vector<8x1x32xf32> to vector<8x2x32xf32>
    %11 = arith.subf %7, %10 : vector<8x2x32xf32>
    %12 = math.exp %11 : vector<8x2x32xf32>
    %cst_6 = arith.constant dense<0.000000e+00> : vector<8x32xf32>
    %13 = vector.multi_reduction <add>, %12, %cst_6 [1] : vector<8x2x32xf32> to vector<8x32xf32>
    %14 = vector.shape_cast %13 : vector<8x32xf32> to vector<8x1x32xf32>
    %15 = vector.broadcast %14 : vector<8x1x32xf32> to vector<8x2x32xf32>
    %16 = arith.divf %12, %15 : vector<8x2x32xf32>
    %c0_7 = arith.constant 0 : index
    %c0_8 = arith.constant 0 : index
    %17 = vector.load %arg4[%c0_7, %c0_8] : memref<1x32xf32, #tpu.memory_space<vmem>>, vector<1x32xf32>
    %18 = vector.shape_cast %17 : vector<1x32xf32> to vector<1x1x32xf32>
    %19 = vector.broadcast %18 : vector<1x1x32xf32> to vector<8x2x32xf32>
    %20 = arith.mulf %16, %19 : vector<8x2x32xf32>
    %cst_9 = arith.constant dense<0.000000e+00> : vector<8x2xf32>
    %21 = vector.multi_reduction <add>, %20, %cst_9 [2] : vector<8x2x32xf32> to vector<8x2xf32>
    %cst_10 = arith.constant 0.000000e+00 : f32
    %22 = vector.broadcast %cst_10 : f32 to vector<8x2xf32>
    %23 = arith.maximumf %21, %22 : vector<8x2xf32>
    %24 = tpu.transpose %23, [1, 0] : vector<8x2xf32> -> vector<2x8xf32>
    %c0_11 = arith.constant 0 : index
    %c0_12 = arith.constant 0 : index
    %25 = vector.load %arg5[%c0_11, %c0_12] : memref<2x8xf32, #tpu.memory_space<vmem>>, vector<2x8xf32>
    tpu.vector_store %arg5[%c0_11, %c0_12], %24 {strides = array<i32>} : memref<2x8xf32, #tpu.memory_space<vmem>>, vector<2x8xf32>,
    return
  }
  func.func @transform_0(%arg0: i32) -> (i32, i32) {
    %c0_i32 = arith.constant 0 : i32
    %c0_i32_0 = arith.constant 0 : i32
    %c0_i32_1 = arith.constant 0 : i32
    return %c0_i32, %c0_i32_0 : i32, i32
  }
  func.func @transform_1(%arg0: i32) -> (i32, i32) {
    %c0_i32 = arith.constant 0 : i32
    %c0_i32_0 = arith.constant 0 : i32
    return %arg0, %c0_i32 : i32, i32
  }
  func.func @transform_2(%arg0: i32) -> (i32, i32) {
    %c0_i32 = arith.constant 0 : i32
    %c0_i32_0 = arith.constant 0 : i32
    %c0_i32_1 = arith.constant 0 : i32
    return %c0_i32, %c0_i32_0 : i32, i32
  }
  func.func @transform_3(%arg0: i32) -> (i32, i32) {
    %c0_i32 = arith.constant 0 : i32
    %c0_i32_0 = arith.constant 0 : i32
    %c0_i32_1 = arith.constant 0 : i32
    return %c0_i32, %c0_i32_0 : i32, i32
  }
  func.func @transform_4(%arg0: i32) -> (i32, i32) {
    %c0_i32 = arith.constant 0 : i32
    %c0_i32_0 = arith.constant 0 : i32
    return %c0_i32, %arg0 : i32, i32
  }
}

</mosaic_0001>

<llo_original>
// kernel: tpu_custom_call.1
$region0: #{tpu_custom_call.1}
  #allocation0 [shape = 'u32[]', space=smem, size = 0x4, offset = 0x4, fixed_abs, tag = 'smem constant byte address 0x4 - core index']
  #allocation1 [shape = 'u32[144,128]{1,0:T(1,128)}', space=vmem, size = 0x12000, scoped, tag = 'internal scratch']
  %s0 = inlined_call_operand.hbm [shape: f32[2,32], index: 0, kind: input, shape index: {}]
  %s1 = inlined_call_operand.hbm [shape: f32[16,32], index: 1, kind: input, shape index: {}]
  %s2 = inlined_call_operand.hbm [shape: f32[32,32], index: 2, kind: input, shape index: {}]
  %s3 = inlined_call_operand.vmem [shape: f32[1,32], index: 3, kind: input, shape index: {}]
  %s4 = inlined_call_operand.hbm [shape: f32[2,8], index: 4, kind: output, shape index: {}]
  %s5 = sld [smem:[#allocation0]]
  $region38: #{tpu_custom_call.1} parent=0
    _
  %s7 = ssub.s32 1, %s5
  %s8 = scalar_select 0, %s7, %s5
  $region1: #{tpu_custom_call.1} parent=0
    #allocation2 [shape = 'u8[1024]{0}', space=vmem, size = 0x400, scoped, tag = 'input window, operand 0, single buffered']
    #allocation3 [shape = 's32[1]{0}', space=sflag, size = 0x4, scoped, tag = 'scoped memory for tpu_custom_call.1']
    #allocation4 [shape = 's32[1]{0}', space=sflag, size = 0x4, scoped, tag = 'scoped memory for tpu_custom_call.1']
    #allocation5 [shape = 'u8[8192]{0}', space=vmem, size = 0x2000, scoped, tag = 'input window, operand 1, single buffered']
    #allocation6 [shape = 's32[1]{0}', space=sflag, size = 0x4, scoped, tag = 'scoped memory for tpu_custom_call.1']
    #allocation7 [shape = 'u8[16384]{0}', space=vmem, size = 0x4000, scoped, tag = 'input window, operand 2, single buffered']
    #allocation8 [shape = 'u8[1024]{0}', space=vmem, size = 0x400, scoped, tag = 'output window, operand 0, single buffered']
    %9 = vsyncpa [#allocation3], 0
    %10 = vsyncpa [#allocation6], 0
    %11 = vsyncpa [#allocation4], 0
    // Predicated region
    $region2: #{tpu_custom_call.1} parent=1 // pred_check
      _
    $region3: #{tpu_custom_call.1} parent=1 // pred_check_branch
      %13 = sbr.rel (0) target = $region5
    $region4: #{tpu_custom_call.1} parent=1 // pred_region
      %s15 = ssub.s32 32, 32
      %16 = vsyncadd [#allocation3], %s15
      %s18 = sshll.u32 [#allocation2], 4
      %s19 = int_to_ptr.vmem [resolvable:$true] %s18
      %21 = dma.hbm_to_vmem [thread:$0]  %s0, 32, %s19, [#allocation3]
    $region5: #{tpu_custom_call.1} parent=1 // pred_fallthru
      _
    // Predicated region
    $region6: #{tpu_custom_call.1} parent=1 // pred_check
      _
    $region7: #{tpu_custom_call.1} parent=1 // pred_check_branch
      %23 = sbr.rel (0) target = $region9
    $region8: #{tpu_custom_call.1} parent=1 // pred_region
      %s25 = ssub.s32 256, 256
      %26 = vsyncadd [#allocation6], %s25
      %s27 = sshll.u32 [#allocation5], 4
      %s28 = int_to_ptr.vmem [resolvable:$true] %s27
      %33 = dma.hbm_to_vmem [thread:$0]  %s1, 256, %s28, [#allocation6], 128, 128, 8
    $region9: #{tpu_custom_call.1} parent=1 // pred_fallthru
      _
    // Predicated region
    $region10: #{tpu_custom_call.1} parent=1 // pred_check
      _
    $region11: #{tpu_custom_call.1} parent=1 // pred_check_branch
      %35 = sbr.rel (0) target = $region13
    $region12: #{tpu_custom_call.1} parent=1 // pred_region
      %s37 = ssub.s32 512, 512
      %38 = vsyncadd [#allocation6], %s37
      %s39 = sshll.u32 [#allocation7], 4
      %s40 = int_to_ptr.vmem [resolvable:$true] %s39
      %45 = dma.hbm_to_vmem [thread:$0]  %s2, 512, %s40, [#allocation6], 128, 128, 8
    $region13: #{tpu_custom_call.1} parent=1 // pred_fallthru
      _
    // Predicated region
    $region14: #{tpu_custom_call.1} parent=1 // pred_check
      _
    $region15: #{tpu_custom_call.1} parent=1 // pred_check_branch
      %47 = sbr.rel (0) target = $region17
    $region16: #{tpu_custom_call.1} parent=1 // pred_region
      _
    $region17: #{tpu_custom_call.1} parent=1 // pred_fallthru
      _
    // Predicated region
    $region18: #{tpu_custom_call.1} parent=1 // pred_check
      _
    $region19: #{tpu_custom_call.1} parent=1 // pred_check_branch
      %49 = sbr.rel (0) target = $region21
    $region20: #{tpu_custom_call.1} parent=1 // pred_region
      %50 = dma.done [#allocation3], 32
    $region21: #{tpu_custom_call.1} parent=1 // pred_fallthru
      _
    // Predicated region
    $region22: #{tpu_custom_call.1} parent=1 // pred_check
      _
    $region23: #{tpu_custom_call.1} parent=1 // pred_check_branch
      %52 = sbr.rel (0) target = $region25
    $region24: #{tpu_custom_call.1} parent=1 // pred_region
      %53 = dma.done [#allocation6], 256
    $region25: #{tpu_custom_call.1} parent=1 // pred_fallthru
      _
    // Predicated region
    $region26: #{tpu_custom_call.1} parent=1 // pred_check
      _
    $region27: #{tpu_custom_call.1} parent=1 // pred_check_branch
      %55 = sbr.rel (0) target = $region29
    $region28: #{tpu_custom_call.1} parent=1 // pred_region
      %56 = dma.done [#allocation6], 512
    $region29: #{tpu_custom_call.1} parent=1 // pred_fallthru
      _
    %v57 = vld [vmem:[#allocation5] sm:$0xff]
    %v58 = vld [vmem:[#allocation5 + $0x8] sm:$0xff]
    %v59 = vld [vmem:[#allocation7] sm:$0xff]
    %v60 = vld [vmem:[#allocation7 + $0x8] sm:$0xff]
    %v61 = vld [vmem:[#allocation7 + $0x10] sm:$0xff]
    %v62 = vld [vmem:[#allocation7 + $0x18] sm:$0xff]
    %vm63 = vcmask 261120
    %v65 = vsel %vm63, %v57, 0
    %v68 = vsel %vm63, %v58, 0
    %70 = vmatprep.subr.mxu0 0.0
    %71 = vmatpush1.msra.mxu0 0.0
    %72 = vmatprep.subr.mxu0 0.0
    %73 = vmatpush1.msra.mxu0 0.0
    %74 = vmatprep.subr.mxu0 0.0
    %75 = vmatpush1.msra.mxu0 0.0
    %76 = vmatprep.subr.mxu0 0.0
    %77 = vmatpush1.msra.mxu0 0.0
    %78 = vmatprep.subr.mxu0 0.0
    %79 = vmatpush1.msra.mxu0 0.0
    %80 = vmatprep.subr.mxu0 0.0
    %81 = vmatpush1.msra.mxu0 0.0
    %82 = vmatprep.subr.mxu0 0.0
    %83 = vmatpush1.msra.mxu0 0.0
    %84 = vmatprep.subr.mxu0 0.0
    %85 = vmatpush1.msra.mxu0 0.0
    %86 = vmatprep.subr.mxu0 0.0
    %87 = vmatpush1.msra.mxu0 0.0
    %88 = vmatprep.subr.mxu0 0.0
    %89 = vmatpush1.msra.mxu0 0.0
    %90 = vmatprep.subr.mxu0 0.0
    %91 = vmatpush1.msra.mxu0 0.0
    %92 = vmatprep.subr.mxu0 0.0
    %93 = vmatpush1.msra.mxu0 0.0
    %94 = vmatprep.subr.mxu0 0.0
    %95 = vmatpush1.msra.mxu0 %v62
    %96 = vmatprep.subr.mxu0 0.0
    %97 = vmatpush1.msra.mxu0 %v61
    %98 = vmatprep.subr.mxu0 0.0
    %99 = vmatpush1.msra.mxu0 %v60
    %100 = vmatprep.subr.mxu0 0.0
    %101 = vmatpush1.msra.mxu0 %v59
    %102 = vmatprep.subr.mxu0 0.0
    %103 = vmatpush2.msra.mxu0 0.0
    %104 = vmatprep.subr.mxu0 0.0
    %105 = vmatpush2.msra.mxu0 0.0
    %106 = vmatprep.subr.mxu0 0.0
    %107 = vmatpush2.msra.mxu0 0.0
    %108 = vmatprep.subr.mxu0 0.0
    %109 = vmatpush2.msra.mxu0 0.0
    %110 = vmatprep.subr.mxu0 0.0
    %111 = vmatpush2.msra.mxu0 0.0
    %112 = vmatprep.subr.mxu0 0.0
    %113 = vmatpush2.msra.mxu0 0.0
    %114 = vmatprep.subr.mxu0 0.0
    %115 = vmatpush2.msra.mxu0 0.0
    %116 = vmatprep.subr.mxu0 0.0
    %117 = vmatpush2.msra.mxu0 0.0
    %118 = vmatprep.subr.mxu0 0.0
    %119 = vmatpush2.msra.mxu0 0.0
    %120 = vmatprep.subr.mxu0 0.0
    %121 = vmatpush2.msra.mxu0 0.0
    %122 = vmatprep.subr.mxu0 0.0
    %123 = vmatpush2.msra.mxu0 0.0
    %124 = vmatprep.subr.mxu0 0.0
    %125 = vmatpush2.msra.mxu0 0.0
    %126 = vmatprep.subr.mxu0 0.0
    %127 = vmatpush2.msra.mxu0 0.0
    %128 = vmatprep.subr.mxu0 0.0
    %129 = vmatpush2.msra.mxu0 0.0
    %130 = vmatprep.subr.mxu0 0.0
    %131 = vmatpush2.msra.mxu0 0.0
    %132 = vmatprep.subr.mxu0 0.0
    %133 = vmatpush2.msra.mxu0 0.0
    %134 = vmatprep.mubr.f32.mxu0 0.0
    %135 = vmatmul.mubr.f32.gmra.mxu0 %v65
    %v136 = vpop.f32.mrf.mxu0
    %v137 = vadd.f32 0.0, %v136
    %v138 = vpop.f32.mrf.mxu0
    %139 = vmatprep.mubr.f32.mxu0 0.0
    %140 = vmatmul.mubr.f32.gmra.mxu0 %v68
    %v141 = vpop.f32.mrf.mxu0
    %v142 = vadd.f32 0.0, %v141
    %v143 = vpop.f32.mrf.mxu0
    %144 = vdwg.mxu0
    %v147 = vcombine.high %v137, %v137
    %v149 = vunpack.c.l.s4 1983009808
    %v150 = vunpack.c.0.s8 %v149
    %v151 = vlaneseq
    %v152 = vshrl.u32 %v151, 7
    %v153 = vsub.s32 %v150, %v152
    %v154 = vrot.slane %v137, %v153
    %v156 = vunpack.c.l.s4 1983009808
    %v157 = vunpack.c.0.s8 %v156
    %v158 = vlaneseq
    %v159 = vshrl.u32 %v158, 7
    %v160 = vsub.s32 %v157, %v159
    %v161 = vrot.slane %v147, %v160
    %v162 = vcombine.high %v154, %v154
    %v163 = vcombine.high %v161, %v161
    %v164 = vcombine.high %v142, %v142
    %v166 = vunpack.c.l.s4 1983009808
    %v167 = vunpack.c.0.s8 %v166
    %v168 = vlaneseq
    %v169 = vshrl.u32 %v168, 7
    %v170 = vsub.s32 %v167, %v169
    %v171 = vrot.slane %v142, %v170
    %v173 = vunpack.c.l.s4 1983009808
    %v174 = vunpack.c.0.s8 %v173
    %v175 = vlaneseq
    %v176 = vshrl.u32 %v175, 7
    %v177 = vsub.s32 %v174, %v176
    %v178 = vrot.slane %v164, %v177
    %v179 = vcombine.high %v171, %v171
    %v180 = vcombine.high %v178, %v178
    %v189 = vld [vmem:[#allocation2] sm:$0x3]
    %v190 = vadd.f32 %v154, %v189
    %v191 = vadd.f32 %v162, %v189
    %v192 = vadd.f32 %v161, %v189
    %v193 = vadd.f32 %v163, %v189
    %v194 = vadd.f32 %v171, %v189
    %v195 = vadd.f32 %v179, %v189
    %v196 = vadd.f32 %v178, %v189
    %v197 = vadd.f32 %v180, %v189
    %vm198 = vcmask 254976
    %v199 = vsel %vm198, %v190, -inf
    %v200 = vrot.slane %v199, 4
    %v201 = vmax.f32 %v199, %v200
    %v202 = vrot.slane %v201, 2
    %v203 = vmax.f32 %v201, %v202
    %v204 = vrot.slane %v203, 1
    %v205 = vmax.f32 %v203, %v204
    %v206 = vsel %vm198, %v191, -inf
    %v207 = vrot.slane %v206, 4
    %v208 = vmax.f32 %v206, %v207
    %v209 = vrot.slane %v208, 2
    %v210 = vmax.f32 %v208, %v209
    %v211 = vrot.slane %v210, 1
    %v212 = vmax.f32 %v210, %v211
    %v213 = vsel %vm198, %v192, -inf
    %v214 = vrot.slane %v213, 4
    %v215 = vmax.f32 %v213, %v214
    %v216 = vrot.slane %v215, 2
    %v217 = vmax.f32 %v215, %v216
    %v218 = vrot.slane %v217, 1
    %v219 = vmax.f32 %v217, %v218
    %v220 = vsel %vm198, %v193, -inf
    %v221 = vrot.slane %v220, 4
    %v222 = vmax.f32 %v220, %v221
    %v223 = vrot.slane %v222, 2
    %v224 = vmax.f32 %v222, %v223
    %v225 = vrot.slane %v224, 1
    %v226 = vmax.f32 %v224, %v225
    %v227 = vsel %vm198, %v194, -inf
    %v228 = vrot.slane %v227, 4
    %v229 = vmax.f32 %v227, %v228
    %v230 = vrot.slane %v229, 2
    %v231 = vmax.f32 %v229, %v230
    %v232 = vrot.slane %v231, 1
    %v233 = vmax.f32 %v231, %v232
    %v234 = vsel %vm198, %v195, -inf
    %v235 = vrot.slane %v234, 4
    %v236 = vmax.f32 %v234, %v235
    %v237 = vrot.slane %v236, 2
    %v238 = vmax.f32 %v236, %v237
    %v239 = vrot.slane %v238, 1
    %v240 = vmax.f32 %v238, %v239
    %v241 = vsel %vm198, %v196, -inf
    %v242 = vrot.slane %v241, 4
    %v243 = vmax.f32 %v241, %v242
    %v244 = vrot.slane %v243, 2
    %v245 = vmax.f32 %v243, %v244
    %v246 = vrot.slane %v245, 1
    %v247 = vmax.f32 %v245, %v246
    %v248 = vsel %vm198, %v197, -inf
    %v249 = vrot.slane %v248, 4
    %v250 = vmax.f32 %v248, %v249
    %v251 = vrot.slane %v250, 2
    %v252 = vmax.f32 %v250, %v251
    %v253 = vrot.slane %v252, 1
    %v254 = vmax.f32 %v252, %v253
    %v255 = vsub.f32 %v190, %v205
    %v256 = vsub.f32 %v191, %v212
    %v257 = vsub.f32 %v192, %v219
    %v258 = vsub.f32 %v193, %v226
    %v259 = vsub.f32 %v194, %v233
    %v260 = vsub.f32 %v195, %v240
    %v261 = vsub.f32 %v196, %v247
    %v262 = vsub.f32 %v197, %v254
    %v263 = vmul.f32 %v255, 1.442695
    %v264 = vpow.pop %v263
    %v265 = vmul.f32 %v256, 1.442695
    %v266 = vpow.pop %v265
    %v267 = vmul.f32 %v257, 1.442695
    %v268 = vpow.pop %v267
    %v269 = vmul.f32 %v258, 1.442695
    %v270 = vpow.pop %v269
    %v271 = vmul.f32 %v259, 1.442695
    %v272 = vpow.pop %v271
    %v273 = vmul.f32 %v260, 1.442695
    %v274 = vpow.pop %v273
    %v275 = vmul.f32 %v261, 1.442695
    %v276 = vpow.pop %v275
    %v277 = vmul.f32 %v262, 1.442695
    %v278 = vpow.pop %v277
    %v279 = vsel %vm198, %v264, 0.0
    %v280 = vrot.slane %v279, 4
    %v281 = vadd.f32 %v279, %v280
    %v282 = vrot.slane %v281, 2
    %v283 = vadd.f32 %v281, %v282
    %v284 = vrot.slane %v283, 1
    %v285 = vadd.f32 %v283, %v284
    %v286 = vsel %vm198, %v266, 0.0
    %v287 = vrot.slane %v286, 4
    %v288 = vadd.f32 %v286, %v287
    %v289 = vrot.slane %v288, 2
    %v290 = vadd.f32 %v288, %v289
    %v291 = vrot.slane %v290, 1
    %v292 = vadd.f32 %v290, %v291
    %v293 = vsel %vm198, %v268, 0.0
    %v294 = vrot.slane %v293, 4
    %v295 = vadd.f32 %v293, %v294
    %v296 = vrot.slane %v295, 2
    %v297 = vadd.f32 %v295, %v296
    %v298 = vrot.slane %v297, 1
    %v299 = vadd.f32 %v297, %v298
    %v300 = vsel %vm198, %v270, 0.0
    %v301 = vrot.slane %v300, 4
    %v302 = vadd.f32 %v300, %v301
    %v303 = vrot.slane %v302, 2
    %v304 = vadd.f32 %v302, %v303
    %v305 = vrot.slane %v304, 1
    %v306 = vadd.f32 %v304, %v305
    %v307 = vsel %vm198, %v272, 0.0
    %v308 = vrot.slane %v307, 4
    %v309 = vadd.f32 %v307, %v308
    %v310 = vrot.slane %v309, 2
    %v311 = vadd.f32 %v309, %v310
    %v312 = vrot.slane %v311, 1
    %v313 = vadd.f32 %v311, %v312
    %v314 = vsel %vm198, %v274, 0.0
    %v315 = vrot.slane %v314, 4
    %v316 = vadd.f32 %v314, %v315
    %v317 = vrot.slane %v316, 2
    %v318 = vadd.f32 %v316, %v317
    %v319 = vrot.slane %v318, 1
    %v320 = vadd.f32 %v318, %v319
    %v321 = vsel %vm198, %v276, 0.0
    %v322 = vrot.slane %v321, 4
    %v323 = vadd.f32 %v321, %v322
    %v324 = vrot.slane %v323, 2
    %v325 = vadd.f32 %v323, %v324
    %v326 = vrot.slane %v325, 1
    %v327 = vadd.f32 %v325, %v326
    %v328 = vsel %vm198, %v278, 0.0
    %v329 = vrot.slane %v328, 4
    %v330 = vadd.f32 %v328, %v329
    %v331 = vrot.slane %v330, 2
    %v332 = vadd.f32 %v330, %v331
    %v333 = vrot.slane %v332, 1
    %v334 = vadd.f32 %v332, %v333
    %v335 = vrcp.pop %v285
    %v336 = vmul.f32 %v264, %v335
    %v337 = vrcp.pop %v292
    %v338 = vmul.f32 %v266, %v337
    %v339 = vrcp.pop %v299
    %v340 = vmul.f32 %v268, %v339
    %v341 = vrcp.pop %v306
    %v342 = vmul.f32 %v270, %v341
    %v343 = vrcp.pop %v313
    %v344 = vmul.f32 %v272, %v343
    %v345 = vrcp.pop %v320
    %v346 = vmul.f32 %v274, %v345
    %v347 = vrcp.pop %v327
    %v348 = vmul.f32 %v276, %v347
    %v349 = vrcp.pop %v334
    %v350 = vmul.f32 %v278, %v349
    %v351 = vld [vmem:[%s3] sm:$0x1]
    %v353 = vlaneseq
    %v354 = vshrl.u32 %v353, 7
    %v355 = vsub.s32 0, %v354
    %v356 = vrot.slane %v351, %v355
    %v358 = vmul.f32 %v336, %v356
    %v359 = vmul.f32 %v338, %v356
    %v360 = vmul.f32 %v340, %v356
    %v361 = vmul.f32 %v342, %v356
    %v362 = vmul.f32 %v344, %v356
    %v363 = vmul.f32 %v346, %v356
    %v364 = vmul.f32 %v348, %v356
    %v365 = vmul.f32 %v350, %v356
    %v366 = vsel %vm198, %v358, 0.0
    %367 = vadd.xlane.f32.xlu0 %v366
    %v368 = vpop.xlane.xlu0 %367
    %v369 = vsel %vm198, %v359, 0.0
    %370 = vadd.xlane.f32.xlu0 %v369
    %v371 = vpop.xlane.xlu0 %370
    %v372 = vsel %vm198, %v360, 0.0
    %373 = vadd.xlane.f32.xlu0 %v372
    %v374 = vpop.xlane.xlu0 %373
    %v375 = vsel %vm198, %v361, 0.0
    %376 = vadd.xlane.f32.xlu0 %v375
    %v377 = vpop.xlane.xlu0 %376
    %v378 = vsel %vm198, %v362, 0.0
    %379 = vadd.xlane.f32.xlu0 %v378
    %v380 = vpop.xlane.xlu0 %379
    %v381 = vsel %vm198, %v363, 0.0
    %382 = vadd.xlane.f32.xlu0 %v381
    %v383 = vpop.xlane.xlu0 %382
    %v384 = vsel %vm198, %v364, 0.0
    %385 = vadd.xlane.f32.xlu0 %v384
    %v386 = vpop.xlane.xlu0 %385
    %v387 = vsel %vm198, %v365, 0.0
    %388 = vadd.xlane.f32.xlu0 %v387
    %v389 = vpop.xlane.xlu0 %388
    %v390 = vmax.f32 %v368, 0.0
    %v391 = vmax.f32 %v371, 0.0
    %v392 = vmax.f32 %v374, 0.0
    %v393 = vmax.f32 %v377, 0.0
    %v394 = vmax.f32 %v380, 0.0
    %v395 = vmax.f32 %v383, 0.0
    %v396 = vmax.f32 %v386, 0.0
    %v397 = vmax.f32 %v389, 0.0
    %v406 = vlaneseq
    %v407 = vand.u32 %v406, 127
    %v408 = vlaneseq
    %v409 = vshrl.u32 %v408, 7
    %v410 = vsub.s32 %v407, %v409
    %v411 = vrot.slane %v390, %v410
    %v412 = vlaneseq
    %v413 = vshrl.u32 %v412, 7
    %v414 = vsub.s32 %v407, %v413
    %v415 = vrot.slane %v391, %v414
    %v416 = vlaneseq
    %v417 = vshrl.u32 %v416, 7
    %v418 = vsub.s32 %v407, %v417
    %v419 = vrot.slane %v392, %v418
    %v420 = vlaneseq
    %v421 = vshrl.u32 %v420, 7
    %v422 = vsub.s32 %v407, %v421
    %v423 = vrot.slane %v393, %v422
    %v424 = vlaneseq
    %v425 = vshrl.u32 %v424, 7
    %v426 = vsub.s32 %v407, %v425
    %v427 = vrot.slane %v394, %v426
    %v428 = vlaneseq
    %v429 = vshrl.u32 %v428, 7
    %v430 = vsub.s32 %v407, %v429
    %v431 = vrot.slane %v395, %v430
    %v432 = vlaneseq
    %v433 = vshrl.u32 %v432, 7
    %v434 = vsub.s32 %v407, %v433
    %v435 = vrot.slane %v396, %v434
    %v436 = vlaneseq
    %v437 = vshrl.u32 %v436, 7
    %v438 = vsub.s32 %v407, %v437
    %v439 = vrot.slane %v397, %v438
    %vm440 = vcmask 1041409
    %v441 = vsel %vm440, %v415, %v411
    %vm442 = vcmask 1042434
    %v443 = vsel %vm442, %v419, %v441
    %vm444 = vcmask 1043459
    %v445 = vsel %vm444, %v423, %v443
    %vm446 = vcmask 1044484
    %v447 = vsel %vm446, %v427, %v445
    %vm448 = vcmask 1045509
    %v449 = vsel %vm448, %v431, %v447
    %vm450 = vcmask 1046534
    %v451 = vsel %vm450, %v435, %v449
    %vm452 = vcmask 1047559
    %v453 = vsel %vm452, %v439, %v451
    %455 = vxpose.xlu0.b32.start [1/16] %v453, 128
    %456 = vxpose.xlu0.b32.cont [2/16] 0.0, 128
    %457 = vxpose.xlu0.b32.cont [3/16] 0.0, 128
    %458 = vxpose.xlu0.b32.cont [4/16] 0.0, 128
    %459 = vxpose.xlu0.b32.cont [5/16] 0.0, 128
    %460 = vxpose.xlu0.b32.cont [6/16] 0.0, 128
    %461 = vxpose.xlu0.b32.cont [7/16] 0.0, 128
    %462 = vxpose.xlu0.b32.cont [8/16] 0.0, 128
    %463 = vxpose.xlu0.b32.cont [9/16] 0.0, 128
    %464 = vxpose.xlu0.b32.cont [10/16] 0.0, 128
    %465 = vxpose.xlu0.b32.cont [11/16] 0.0, 128
    %466 = vxpose.xlu0.b32.cont [12/16] 0.0, 128
    %467 = vxpose.xlu0.b32.cont [13/16] 0.0, 128
    %468 = vxpose.xlu0.b32.cont [14/16] 0.0, 128
    %469 = vxpose.xlu0.b32.cont [15/16] 0.0, 128
    %470 = vxpose.xlu0.b32.end [16/16] 0.0, 128
    %v471 = vpop.trf.xlu0
    %v472 = vpop.trf.xlu0
    %v473 = vpop.trf.xlu0
    %v474 = vpop.trf.xlu0
    %v475 = vpop.trf.xlu0
    %v476 = vpop.trf.xlu0
    %v477 = vpop.trf.xlu0
    %v478 = vpop.trf.xlu0
    %v479 = vpop.trf.xlu0
    %v480 = vpop.trf.xlu0
    %v481 = vpop.trf.xlu0
    %v482 = vpop.trf.xlu0
    %v483 = vpop.trf.xlu0
    %v484 = vpop.trf.xlu0
    %v485 = vpop.trf.xlu0
    %v486 = vpop.trf.xlu0
    %vm487 = vcmask 58368
    %488 = vst.msk [vmem:[#allocation8] sm:$0x3] %vm487, %v471
    // Predicated region
    $region30: #{tpu_custom_call.1} parent=1 // pred_check
      _
    $region31: #{tpu_custom_call.1} parent=1 // pred_check_branch
      %490 = sbr.rel (0) target = $region33
    $region32: #{tpu_custom_call.1} parent=1 // pred_region
      %s492 = ssub.s32 32, 32
      %493 = vsyncadd [#allocation4], %s492
      %s495 = sshll.u32 [#allocation8], 4
      %s496 = int_to_ptr.vmem [resolvable:$true] %s495
      %498 = dma.vmem_to_hbm [thread:$0]  %s496, 32, %s4, [#allocation4]
    $region33: #{tpu_custom_call.1} parent=1 // pred_fallthru
      _
    // Predicated region
    $region34: #{tpu_custom_call.1} parent=1 // pred_check
      _
    $region35: #{tpu_custom_call.1} parent=1 // pred_check_branch
      %500 = sbr.rel (0) target = $region37
    $region36: #{tpu_custom_call.1} parent=1 // pred_region
      %501 = dma.done [#allocation4], 32
    $region37: #{tpu_custom_call.1} parent=1 // pred_fallthru
      _
    %502 = vsyncpa [#allocation3], 1
    %503 = vsyncpa [#allocation6], 1
    %504 = vsyncpa [#allocation4], 1

</llo_original>
